<compile_context>
chip_gen: v5e
topology: v5e:2x2
jax: 0.10.0
libtpu: 0.0.40
codegen_flags: <defaults>
</compile_context>

<pallas_src>
import jax
import jax.numpy as jnp
from jax.experimental import pallas as pl
from jax.experimental.pallas import tpu as pltpu


# ----------------------------------------------------------------------------
# LSTM recurrence kernel: grid over time steps, h/c carried in VMEM scratch.
# PyTorch gate order (i, f, g, o); gates = x @ W_x + h @ W_h + b, with
# W_x = W_ih^T [E, 4H], W_h = W_hh^T [H, 4H], b = (b_ih + b_hh) [1, 4H].
# ----------------------------------------------------------------------------
def lstm_kernel(x_ref, h0_ref, c0_ref, wx_ref, wh_ref, b_ref,
                out_ref, hn_ref, cn_ref,
                h_sc, c_sc):
    t = pl.program_id(0)
    n_steps = pl.num_programs(0)

    @pl.when(t == 0)
    def _():
        h_sc[...] = h0_ref[...]
        c_sc[...] = c0_ref[...]

    x = x_ref[0]                  # [B, E]  bf16
    h = h_sc[...]                 # [B, H]  f32 state
    c = c_sc[...]                 # [B, H]  f32 state
    H = h_sc.shape[-1]

    # Two fused MXU matmuls (bf16 inputs, f32 accumulation) + single bias add.
    gates = (jnp.dot(x, wx_ref[...], preferred_element_type=jnp.float32)
             + jnp.dot(h.astype(jnp.bfloat16), wh_ref[...],
                       preferred_element_type=jnp.float32)
             + b_ref[...])        # [B, 4H] f32

    i_g = jax.nn.sigmoid(gates[:, 0 * H:1 * H])
    f_g = jax.nn.sigmoid(gates[:, 1 * H:2 * H])
    g_g = jnp.tanh(gates[:, 2 * H:3 * H])
    o_g = jax.nn.sigmoid(gates[:, 3 * H:4 * H])

    c_new = f_g * c + i_g * g_g
    h_new = o_g * jnp.tanh(c_new)

    h_sc[...] = h_new
    c_sc[...] = c_new

    out_ref[0, :, :] = h_new.astype(out_ref.dtype)   # per-step hidden (bf16)

    @pl.when(t == n_steps - 1)
    def _():
        hn_ref[...] = h_new
        cn_ref[...] = c_new


def run_lstm(emb_sbe, h0, c0, wx, wh, b):
    """emb_sbe: [S, B, E] bf16 (B already padded to a multiple of 8).
    wx: [E, 4H] bf16, wh: [H, 4H] bf16, b: [1, 4H] f32.
    Returns (out [S,B,H] bf16, h_n [B,H] f32, c_n [B,H] f32)."""
    S, B, E = emb_sbe.shape
    H = h0.shape[-1]

    fixed2 = lambda t: (0, 0)

    in_specs = [
        pl.BlockSpec((1, B, E), lambda t: (t, 0, 0)),   # x, time-major stream
        pl.BlockSpec((B, H), fixed2),                   # h0
        pl.BlockSpec((B, H), fixed2),                   # c0
        # TODO(synk): for large H on v7x (64 MiB VMEM) add
        # pipeline_mode=pl.Buffered(1) to these loop-invariant weight specs.
        pl.BlockSpec((E, 4 * H), fixed2),               # W_x
        pl.BlockSpec((H, 4 * H), fixed2),               # W_h
        pl.BlockSpec((1, 4 * H), fixed2),               # fused bias
    ]
    out_specs = (
        pl.BlockSpec((1, B, H), lambda t: (t, 0, 0)),   # per-step hidden outputs
        pl.BlockSpec((B, H), fixed2),                   # h_n (resident)
        pl.BlockSpec((B, H), fixed2),                   # c_n (resident)
    )
    out_shape = (
        jax.ShapeDtypeStruct((S, B, H), jnp.bfloat16),
        jax.ShapeDtypeStruct((B, H), jnp.float32),
        jax.ShapeDtypeStruct((B, H), jnp.float32),
    )

    return pl.pallas_call(
        lstm_kernel,
        out_shape=out_shape,
        grid_spec=pltpu.PrefetchScalarGridSpec(
            num_scalar_prefetch=0,
            grid=(S,),
            in_specs=in_specs,
            out_specs=out_specs,
            scratch_shapes=[pltpu.VMEM((B, H), jnp.float32),
                            pltpu.VMEM((B, H), jnp.float32)],
        ),
        compiler_params=pltpu.CompilerParams(
            dimension_semantics=("arbitrary",)),   # time axis is sequential
    )(emb_sbe, h0, c0, wx, wh, b)


# ----------------------------------------------------------------------------
# Final projection kernel (nn.Linear): logits = x @ W^T + b, tiled over (N, V).
# ----------------------------------------------------------------------------
def fc_kernel(x_ref, w_ref, b_ref, o_ref):
    o_ref[...] = (jnp.dot(x_ref[...], w_ref[...],
                          preferred_element_type=jnp.float32)
                  + b_ref[...]).astype(o_ref.dtype)


def run_fc(x2d, w_t, b, *, tm=256, tn=512):
    """x2d: [N, H] bf16 (N multiple of 8), w_t: [H, V] bf16, b: [1, V] f32 -> [N, V] f32."""
    N, H = x2d.shape
    V = w_t.shape[1]
    tm = min(tm, N)                     # N is a multiple of 8 (batch was padded)
    tn = V if V <= tn else tn           # lane-dense multiple of 128 when V is large

    return pl.pallas_call(
        fc_kernel,
        out_shape=jax.ShapeDtypeStruct((N, V), jnp.float32),
        grid_spec=pltpu.PrefetchScalarGridSpec(
            num_scalar_prefetch=0,
            grid=(pl.cdiv(N, tm), pl.cdiv(V, tn)),
            in_specs=[pl.BlockSpec((tm, H), lambda i, j: (i, 0)),
                      pl.BlockSpec((H, tn), lambda i, j: (0, j)),
                      pl.BlockSpec((1, tn), lambda i, j: (0, j))],
            out_specs=pl.BlockSpec((tm, tn), lambda i, j: (i, j)),
        ),
        compiler_params=pltpu.CompilerParams(
            dimension_semantics=("parallel", "parallel")),
    )(x2d, w_t, b)


# ----------------------------------------------------------------------------
# Full ChatLSTMModel forward
# ----------------------------------------------------------------------------
def chat_lstm_forward(params, user_seq, hidden=None):
    """user_seq: [B, S] int32 token ids.
    Returns (logits [B, S, V], (h_n [1, B, H], c_n [1, B, H]))."""
    B, S = user_seq.shape
    H = params["w_hh"].shape[1]
    V = params["w_fc"].shape[0]

    # Pad batch to a multiple of 8 sublanes (MXU/VPU tile-friendly).
    B_pad = max(8, ((B + 7) // 8) * 8)

    # Embedding lookup (gather) — glue in plain JAX; padding row is zeroed in the table.
    # TODO(synk): could be moved in-kernel via scalar-prefetch + manual DMA gather.
    emb = jnp.take(params["embedding"], user_seq, axis=0)          # [B, S, E]
    emb_sbe = jnp.transpose(emb, (1, 0, 2))                        # [S, B, E]
    emb_sbe = jnp.pad(emb_sbe, ((0, 0), (0, B_pad - B), (0, 0)))
    emb_sbe = emb_sbe.astype(jnp.bfloat16)

    if hidden is None:
        h0 = jnp.zeros((B_pad, H), jnp.float32)
        c0 = jnp.zeros((B_pad, H), jnp.float32)
    else:
        h0 = jnp.pad(hidden[0][0], ((0, B_pad - B), (0, 0))).astype(jnp.float32)
        c0 = jnp.pad(hidden[1][0], ((0, B_pad - B), (0, 0))).astype(jnp.float32)

    # Fuse PyTorch-layout gate weights: [4H, E]/[4H, H] -> [E, 4H]/[H, 4H], bf16.
    wx = params["w_ih"].T.astype(jnp.bfloat16)                     # [E, 4H]
    wh = params["w_hh"].T.astype(jnp.bfloat16)                     # [H, 4H]
    b = (params["b_ih"] + params["b_hh"]).reshape(1, 4 * H).astype(jnp.float32)

    out_sbh, h_n, c_n = run_lstm(emb_sbe, h0, c0, wx, wh, b)

    # Transpose the (small, bf16) hidden tensor to batch-first before the wide FC.
    out_bsh = jnp.transpose(out_sbh, (1, 0, 2))                    # [B_pad, S, H]
    x2d = out_bsh.reshape(B_pad * S, H)

    w_fc_t = params["w_fc"].T.astype(jnp.bfloat16)                 # [H, V]
    b_fc = params["b_fc"].reshape(1, V).astype(jnp.float32)
    logits2d = run_fc(x2d, w_fc_t, b_fc)                           # [B_pad*S, V] f32
    logits = logits2d.reshape(B_pad, S, V)[:B]

    return logits, (h_n[:B][None], c_n[:B][None])


# ----------------------------------------------------------------------------
# Pure-JAX reference for validation
# ----------------------------------------------------------------------------
def reference_forward(params, user_seq):
    B, S = user_seq.shape
    H = params["w_hh"].shape[1]
    emb = jnp.take(params["embedding"], user_seq, axis=0)
    h = jnp.zeros((B, H), jnp.float32)
    c = jnp.zeros((B, H), jnp.float32)
    w_ih, w_hh = params["w_ih"], params["w_hh"]
    b = params["b_ih"] + params["b_hh"]
    outs = []
    for t in range(S):
        x = emb[:, t, :]
        gates = x @ w_ih.T + h @ w_hh.T + b
        i_g = jax.nn.sigmoid(gates[:, 0 * H:1 * H])
        f_g = jax.nn.sigmoid(gates[:, 1 * H:2 * H])
        g_g = jnp.tanh(gates[:, 2 * H:3 * H])
        o_g = jax.nn.sigmoid(gates[:, 3 * H:4 * H])
        c = f_g * c + i_g * g_g
        h = o_g * jnp.tanh(c)
        outs.append(h)
    out = jnp.stack(outs, axis=1)                                  # [B, S, H]
    logits = out @ params["w_fc"].T + params["b_fc"]
    return logits, (h[None], c[None])


def make_params(key, vocab_size, embed_dim, hidden_dim):
    ks = jax.random.split(key, 7)
    scale = 1.0 / jnp.sqrt(hidden_dim)
    emb_tbl = jax.random.normal(ks[0], (vocab_size, embed_dim), jnp.float32) * 0.1
    emb_tbl = emb_tbl.at[0].set(0.0)     # padding_idx = 0
    params = {
        "embedding": emb_tbl,
        "w_ih": jax.random.uniform(ks[1], (4 * hidden_dim, embed_dim),
                                   jnp.float32, -scale, scale),
        "w_hh": jax.random.uniform(ks[2], (4 * hidden_dim, hidden_dim),
                                   jnp.float32, -scale, scale),
        "b_ih": jax.random.uniform(ks[3], (4 * hidden_dim,),
                                   jnp.float32, -scale, scale),
        "b_hh": jax.random.uniform(ks[4], (4 * hidden_dim,),
                                   jnp.float32, -scale, scale),
        "w_fc": jax.random.uniform(ks[5], (vocab_size, hidden_dim),
                                   jnp.float32, -scale, scale),
        "b_fc": jax.random.uniform(ks[6], (vocab_size,),
                                   jnp.float32, -scale, scale),
    }
    return params


if __name__ == "__main__":
    vocab_size, embed_dim, hidden_dim = 64, 32, 32
    batch, seq_len = 2, 8

    key = jax.random.PRNGKey(0)
    pkey, skey = jax.random.split(key)
    params = make_params(pkey, vocab_size, embed_dim, hidden_dim)
    user_seq = jax.random.randint(skey, (batch, seq_len), 0, vocab_size,
                                  dtype=jnp.int32)

    logits, (h_n, c_n) = chat_lstm_forward(params, user_seq)
    jax.block_until_ready((logits, h_n, c_n))

    ref_logits, (ref_h, ref_c) = reference_forward(params, user_seq)
    assert logits.shape == (batch, seq_len, vocab_size)
    assert h_n.shape == (1, batch, hidden_dim) and c_n.shape == (1, batch, hidden_dim)
    assert jnp.allclose(logits, ref_logits, rtol=1e-2, atol=1e-2)
    assert jnp.allclose(h_n, ref_h, rtol=1e-2, atol=1e-2)
    assert jnp.allclose(c_n, ref_c, rtol=1e-2, atol=1e-2)

    print("KERNEL_OK")
</pallas_src>

<mosaic_0001>
module attributes {stable_mosaic.version = 11 : i64} {
  func.func @lstm_kernel(%arg0: i32, %arg1: memref<1x8x32xbf16, #tpu.memory_space<vmem>>, %arg2: memref<8x32xf32, #tpu.memory_space<vmem>>, %arg3: memref<8x32xf32, #tpu.memory_space<vmem>>, %arg4: memref<32x128xbf16, #tpu.memory_space<vmem>>, %arg5: memref<32x128xbf16, #tpu.memory_space<vmem>>, %arg6: memref<1x128xf32, #tpu.memory_space<vmem>>, %arg7: memref<1x8x32xbf16, #tpu.memory_space<vmem>>, %arg8: memref<8x32xf32, #tpu.memory_space<vmem>>, %arg9: memref<8x32xf32, #tpu.memory_space<vmem>>, %arg10: memref<8x32xf32, #tpu.memory_space<vmem>>, %arg11: memref<8x32xf32, #tpu.memory_space<vmem>>) attributes {dimension_semantics = [#tpu.dimension_semantics<arbitrary>], iteration_bounds = array<i64: 8>, scalar_prefetch = 0 : i64, scratch_operands = 2 : i64, tpu.core_type = #tpu.core_type<tc>, window_params = [{transform_indices = @transform_0, window_bounds = array<i64: 1, 8, 32>}, {pipeline_mode = #tpu.pipeline_mode<synchronous>, transform_indices = @transform_1, window_bounds = array<i64: 8, 32>}, {pipeline_mode = #tpu.pipeline_mode<synchronous>, transform_indices = @transform_2, window_bounds = array<i64: 8, 32>}, {pipeline_mode = #tpu.pipeline_mode<synchronous>, transform_indices = @transform_3, window_bounds = array<i64: 32, 128>}, {pipeline_mode = #tpu.pipeline_mode<synchronous>, transform_indices = @transform_4, window_bounds = array<i64: 32, 128>}, {pipeline_mode = #tpu.pipeline_mode<synchronous>, transform_indices = @transform_5, window_bounds = array<i64: 1, 128>}, {transform_indices = @transform_6, window_bounds = array<i64: 1, 8, 32>}, {pipeline_mode = #tpu.pipeline_mode<synchronous>, transform_indices = @transform_7, window_bounds = array<i64: 8, 32>}, {pipeline_mode = #tpu.pipeline_mode<synchronous>, transform_indices = @transform_8, window_bounds = array<i64: 8, 32>}]} {
    %c0_i32 = arith.constant 0 : i32
    %0 = arith.cmpi eq, %arg0, %c0_i32 : i32
    %1 = arith.extui %0 : i1 to i32
    %c0_i32_0 = arith.constant 0 : i32
    %2 = arith.cmpi ne, %1, %c0_i32_0 : i32
    scf.if %2 {
      %c0_25 = arith.constant 0 : index
      %c0_26 = arith.constant 0 : index
      %50 = vector.load %arg2[%c0_25, %c0_26] : memref<8x32xf32, #tpu.memory_space<vmem>>, vector<8x32xf32>
      %c0_27 = arith.constant 0 : index
      %c0_28 = arith.constant 0 : index
      %51 = vector.load %arg10[%c0_27, %c0_28] : memref<8x32xf32, #tpu.memory_space<vmem>>, vector<8x32xf32>
      tpu.vector_store %arg10[%c0_27, %c0_28], %50 {strides = array<i32>} : memref<8x32xf32, #tpu.memory_space<vmem>>, vector<8x32xf32>,
      %c0_29 = arith.constant 0 : index
      %c0_30 = arith.constant 0 : index
      %52 = vector.load %arg3[%c0_29, %c0_30] : memref<8x32xf32, #tpu.memory_space<vmem>>, vector<8x32xf32>
      %c0_31 = arith.constant 0 : index
      %c0_32 = arith.constant 0 : index
      %53 = vector.load %arg11[%c0_31, %c0_32] : memref<8x32xf32, #tpu.memory_space<vmem>>, vector<8x32xf32>
      tpu.vector_store %arg11[%c0_31, %c0_32], %52 {strides = array<i32>} : memref<8x32xf32, #tpu.memory_space<vmem>>, vector<8x32xf32>,
    } else {
    }
    %c0 = arith.constant 0 : index
    %c0_1 = arith.constant 0 : index
    %c0_2 = arith.constant 0 : index
    %3 = vector.load %arg1[%c0, %c0_1, %c0_2] : memref<1x8x32xbf16, #tpu.memory_space<vmem>>, vector<1x8x32xbf16>
    %4 = vector.shape_cast %3 : vector<1x8x32xbf16> to vector<8x32xbf16>
    %c0_3 = arith.constant 0 : index
    %c0_4 = arith.constant 0 : index
    %5 = vector.load %arg10[%c0_3, %c0_4] : memref<8x32xf32, #tpu.memory_space<vmem>>, vector<8x32xf32>
    %c0_5 = arith.constant 0 : index
    %c0_6 = arith.constant 0 : index
    %6 = vector.load %arg11[%c0_5, %c0_6] : memref<8x32xf32, #tpu.memory_space<vmem>>, vector<8x32xf32>
    %c0_7 = arith.constant 0 : index
    %c0_8 = arith.constant 0 : index
    %7 = vector.load %arg4[%c0_7, %c0_8] : memref<32x128xbf16, #tpu.memory_space<vmem>>, vector<32x128xbf16>
    %cst = arith.constant dense<0.000000e+00> : vector<8x128xf32>
    %8 = tpu.matmul %4, %7, %cst {dimension_numbers = #tpu.dot_dimension_numbers<[1], [0], [0], [1], [0, 0, 1, 1], [], []>} : vector<8x32xbf16>, vector<32x128xbf16>, vector<8x128xf32> -> vector<8x128xf32>
    %9 = arith.truncf %5 : vector<8x32xf32> to vector<8x32xbf16>
    %c0_9 = arith.constant 0 : index
    %c0_10 = arith.constant 0 : index
    %10 = vector.load %arg5[%c0_9, %c0_10] : memref<32x128xbf16, #tpu.memory_space<vmem>>, vector<32x128xbf16>
    %cst_11 = arith.constant dense<0.000000e+00> : vector<8x128xf32>
    %11 = tpu.matmul %9, %10, %cst_11 {dimension_numbers = #tpu.dot_dimension_numbers<[1], [0], [0], [1], [0, 0, 1, 1], [], []>} : vector<8x32xbf16>, vector<32x128xbf16>, vector<8x128xf32> -> vector<8x128xf32>
    %12 = arith.addf %8, %11 : vector<8x128xf32>
    %c0_12 = arith.constant 0 : index
    %c0_13 = arith.constant 0 : index
    %13 = vector.load %arg6[%c0_12, %c0_13] : memref<1x128xf32, #tpu.memory_space<vmem>>, vector<1x128xf32>
    %14 = vector.broadcast %13 : vector<1x128xf32> to vector<8x128xf32>
    %15 = arith.addf %12, %14 : vector<8x128xf32>
    %16 = vector.extract_strided_slice %15 {offsets = [0, 0], sizes = [8, 32], strides = [1, 1]} : vector<8x128xf32> to vector<8x32xf32>
    %17 = arith.negf %16 : vector<8x32xf32>
    %18 = math.exp %17 : vector<8x32xf32>
    %cst_14 = arith.constant 1.000000e+00 : f32
    %19 = vector.broadcast %cst_14 : f32 to vector<8x32xf32>
    %20 = arith.addf %19, %18 : vector<8x32xf32>
    %21 = arith.divf %19, %20 : vector<8x32xf32>
    %22 = vector.extract_strided_slice %15 {offsets = [0, 32], sizes = [8, 32], strides = [1, 1]} : vector<8x128xf32> to vector<8x32xf32>
    %23 = arith.negf %22 : vector<8x32xf32>
    %24 = math.exp %23 : vector<8x32xf32>
    %cst_15 = arith.constant 1.000000e+00 : f32
    %25 = vector.broadcast %cst_15 : f32 to vector<8x32xf32>
    %26 = arith.addf %25, %24 : vector<8x32xf32>
    %27 = arith.divf %25, %26 : vector<8x32xf32>
    %28 = vector.extract_strided_slice %15 {offsets = [0, 64], sizes = [8, 32], strides = [1, 1]} : vector<8x128xf32> to vector<8x32xf32>
    %29 = math.tanh %28 : vector<8x32xf32>
    %30 = vector.extract_strided_slice %15 {offsets = [0, 96], sizes = [8, 32], strides = [1, 1]} : vector<8x128xf32> to vector<8x32xf32>
    %31 = arith.negf %30 : vector<8x32xf32>
    %32 = math.exp %31 : vector<8x32xf32>
    %cst_16 = arith.constant 1.000000e+00 : f32
    %33 = vector.broadcast %cst_16 : f32 to vector<8x32xf32>
    %34 = arith.addf %33, %32 : vector<8x32xf32>
    %35 = arith.divf %33, %34 : vector<8x32xf32>
    %36 = arith.mulf %27, %6 : vector<8x32xf32>
    %37 = arith.mulf %21, %29 : vector<8x32xf32>
    %38 = arith.addf %36, %37 : vector<8x32xf32>
    %39 = math.tanh %38 : vector<8x32xf32>
    %40 = arith.mulf %35, %39 : vector<8x32xf32>
    %c0_17 = arith.constant 0 : index
    %c0_18 = arith.constant 0 : index
    %41 = vector.load %arg10[%c0_17, %c0_18] : memref<8x32xf32, #tpu.memory_space<vmem>>, vector<8x32xf32>
    tpu.vector_store %arg10[%c0_17, %c0_18], %40 {strides = array<i32>} : memref<8x32xf32, #tpu.memory_space<vmem>>, vector<8x32xf32>,
    %c0_19 = arith.constant 0 : index
    %c0_20 = arith.constant 0 : index
    %42 = vector.load %arg11[%c0_19, %c0_20] : memref<8x32xf32, #tpu.memory_space<vmem>>, vector<8x32xf32>
    tpu.vector_store %arg11[%c0_19, %c0_20], %38 {strides = array<i32>} : memref<8x32xf32, #tpu.memory_space<vmem>>, vector<8x32xf32>,
    %43 = arith.truncf %40 : vector<8x32xf32> to vector<8x32xbf16>
    %c0_21 = arith.constant 0 : index
    %c0_22 = arith.constant 0 : index
    %c0_23 = arith.constant 0 : index
    %44 = vector.load %arg7[%c0_21, %c0_22, %c0_23] : memref<1x8x32xbf16, #tpu.memory_space<vmem>>, vector<1x8x32xbf16>
    %45 = vector.shape_cast %44 : vector<1x8x32xbf16> to vector<8x32xbf16>
    %46 = vector.shape_cast %43 : vector<8x32xbf16> to vector<1x8x32xbf16>
    tpu.vector_store %arg7[%c0_21, %c0_22, %c0_23], %46 {strides = array<i32>} : memref<1x8x32xbf16, #tpu.memory_space<vmem>>, vector<1x8x32xbf16>,
    %c7_i32 = arith.constant 7 : i32
    %47 = arith.cmpi eq, %arg0, %c7_i32 : i32
    %48 = arith.extui %47 : i1 to i32
    %c0_i32_24 = arith.constant 0 : i32
    %49 = arith.cmpi ne, %48, %c0_i32_24 : i32
    scf.if %49 {
      %c0_25 = arith.constant 0 : index
      %c0_26 = arith.constant 0 : index
      %50 = vector.load %arg8[%c0_25, %c0_26] : memref<8x32xf32, #tpu.memory_space<vmem>>, vector<8x32xf32>
      tpu.vector_store %arg8[%c0_25, %c0_26], %40 {strides = array<i32>} : memref<8x32xf32, #tpu.memory_space<vmem>>, vector<8x32xf32>,
      %c0_27 = arith.constant 0 : index
      %c0_28 = arith.constant 0 : index
      %51 = vector.load %arg9[%c0_27, %c0_28] : memref<8x32xf32, #tpu.memory_space<vmem>>, vector<8x32xf32>
      tpu.vector_store %arg9[%c0_27, %c0_28], %38 {strides = array<i32>} : memref<8x32xf32, #tpu.memory_space<vmem>>, vector<8x32xf32>,
    } else {
    }
    return
  }
  func.func @transform_0(%arg0: i32) -> (i32, i32, i32) {
    %c0_i32 = arith.constant 0 : i32
    %c0_i32_0 = arith.constant 0 : i32
    %c0_i32_1 = arith.constant 0 : i32
    return %arg0, %c0_i32, %c0_i32_0 : i32, i32, i32
  }
  func.func @transform_1(%arg0: i32) -> (i32, i32) {
    %c0_i32 = arith.constant 0 : i32
    %c0_i32_0 = arith.constant 0 : i32
    %c0_i32_1 = arith.constant 0 : i32
    return %c0_i32, %c0_i32_0 : i32, i32
  }
  func.func @transform_2(%arg0: i32) -> (i32, i32) {
    %c0_i32 = arith.constant 0 : i32
    %c0_i32_0 = arith.constant 0 : i32
    %c0_i32_1 = arith.constant 0 : i32
    return %c0_i32, %c0_i32_0 : i32, i32
  }
  func.func @transform_3(%arg0: i32) -> (i32, i32) {
    %c0_i32 = arith.constant 0 : i32
    %c0_i32_0 = arith.constant 0 : i32
    %c0_i32_1 = arith.constant 0 : i32
    return %c0_i32, %c0_i32_0 : i32, i32
  }
  func.func @transform_4(%arg0: i32) -> (i32, i32) {
    %c0_i32 = arith.constant 0 : i32
    %c0_i32_0 = arith.constant 0 : i32
    %c0_i32_1 = arith.constant 0 : i32
    return %c0_i32, %c0_i32_0 : i32, i32
  }
  func.func @transform_5(%arg0: i32) -> (i32, i32) {
    %c0_i32 = arith.constant 0 : i32
    %c0_i32_0 = arith.constant 0 : i32
    %c0_i32_1 = arith.constant 0 : i32
    return %c0_i32, %c0_i32_0 : i32, i32
  }
  func.func @transform_6(%arg0: i32) -> (i32, i32, i32) {
    %c0_i32 = arith.constant 0 : i32
    %c0_i32_0 = arith.constant 0 : i32
    %c0_i32_1 = arith.constant 0 : i32
    return %arg0, %c0_i32, %c0_i32_0 : i32, i32, i32
  }
  func.func @transform_7(%arg0: i32) -> (i32, i32) {
    %c0_i32 = arith.constant 0 : i32
    %c0_i32_0 = arith.constant 0 : i32
    %c0_i32_1 = arith.constant 0 : i32
    return %c0_i32, %c0_i32_0 : i32, i32
  }
  func.func @transform_8(%arg0: i32) -> (i32, i32) {
    %c0_i32 = arith.constant 0 : i32
    %c0_i32_0 = arith.constant 0 : i32
    %c0_i32_1 = arith.constant 0 : i32
    return %c0_i32, %c0_i32_0 : i32, i32
  }
}

</mosaic_0001>

<llo_original>
// kernel: tpu_custom_call.1
$region0: #{tpu_custom_call.1}
  #allocation0 [shape = 'u32[]', space=smem, size = 0x4, offset = 0x4, fixed_abs, tag = 'smem constant byte address 0x4 - core index']
  #allocation1 [shape = 'u32[72,128]{1,0:T(1,128)}', space=vmem, size = 0x9000, scoped, tag = 'internal scratch']
  #allocation2 [shape = 'f32[8,32]{1,0:T(8,128)}', space=vmem, size = 0x1000, scoped, tag = 'scratch operand']
  #allocation3 [shape = 'f32[8,32]{1,0:T(8,128)}', space=vmem, size = 0x1000, scoped, tag = 'scratch operand']
  %s0 = inlined_call_operand.hbm [shape: bf16[8,8,32], index: 0, kind: input, shape index: {}]
  %s1 = inlined_call_operand.hbm [shape: f32[8,32], index: 1, kind: input, shape index: {}]
  %s2 = inlined_call_operand.hbm [shape: f32[8,32], index: 2, kind: input, shape index: {}]
  %s3 = inlined_call_operand.hbm [shape: bf16[32,128], index: 3, kind: input, shape index: {}]
  %s4 = inlined_call_operand.hbm [shape: bf16[32,128], index: 4, kind: input, shape index: {}]
  %s5 = inlined_call_operand.vmem [shape: f32[1,128], index: 5, kind: input, shape index: {}]
  %s6 = inlined_call_operand.hbm [shape: bf16[8,8,32], index: 6, kind: output, shape index: {0}]
  %s7 = inlined_call_operand.hbm [shape: f32[8,32], index: 7, kind: output, shape index: {1}]
  %s8 = inlined_call_operand.hbm [shape: f32[8,32], index: 8, kind: output, shape index: {2}]
  %9 = xla_tuple %s6, %s7, %s8
  %s10 = sld [smem:[#allocation0]]
  $region101: #{tpu_custom_call.1} parent=0
    _
  %s12 = ssub.s32 1, %s10
  %s13 = scalar_select 0, %s12, %s10
  $region1: #{tpu_custom_call.1} parent=0
    #allocation4 [shape = 'u8[4096]{0}', space=vmem, size = 0x1000, scoped, tag = 'input window, operand 0']
    #allocation5 [shape = 's32[2]{0}', space=sflag, size = 0x8, scoped, tag = 'scoped memory for tpu_custom_call.1']
    #allocation6 [shape = 's32[2]{0}', space=sflag, size = 0x8, scoped, tag = 'scoped memory for tpu_custom_call.1']
    #allocation7 [shape = 'u8[4096]{0}', space=vmem, size = 0x1000, scoped, tag = 'input window, operand 1, single buffered']
    #allocation8 [shape = 's32[1]{0}', space=sflag, size = 0x4, scoped, tag = 'scoped memory for tpu_custom_call.1']
    #allocation9 [shape = 'u8[4096]{0}', space=vmem, size = 0x1000, scoped, tag = 'input window, operand 2, single buffered']
    #allocation10 [shape = 'u8[8192]{0}', space=vmem, size = 0x2000, scoped, tag = 'input window, operand 3, single buffered']
    #allocation11 [shape = 's32[1]{0}', space=sflag, size = 0x4, scoped, tag = 'scoped memory for tpu_custom_call.1']
    #allocation12 [shape = 'u8[8192]{0}', space=vmem, size = 0x2000, scoped, tag = 'input window, operand 4, single buffered']
    #allocation13 [shape = 'u8[4096]{0}', space=vmem, size = 0x1000, scoped, tag = 'output window, operand 0']
    #allocation14 [shape = 'u8[4096]{0}', space=vmem, size = 0x1000, scoped, tag = 'output window, operand 1, single buffered']
    #allocation15 [shape = 's32[1]{0}', space=sflag, size = 0x4, scoped, tag = 'scoped memory for tpu_custom_call.1']
    #allocation16 [shape = 'u8[4096]{0}', space=vmem, size = 0x1000, scoped, tag = 'output window, operand 2, single buffered']
    %14 = vsyncpa [#allocation5], 0
    %s15 = scalar_lea.sflag [#allocation5], 1
    %16 = vsyncpa %s15, 0
    %17 = vsyncpa [#allocation8], 0
    %18 = vsyncpa [#allocation11], 0
    %19 = vsyncpa [#allocation6], 0
    %s20 = scalar_lea.sflag [#allocation6], 1
    %21 = vsyncpa %s20, 0
    %22 = vsyncpa [#allocation15], 0
    loop: start=0, step=1, limit=10
    $region2: #{tpu_custom_call.1} parent=1 // loop_pre_header
      _
    $region3: #{tpu_custom_call.1} parent=1 // loop_header
      %s24 = sphi 0, %s28
      %p25 = scmp.ge.s32.totalorder %s24, 10
      %s34 = sphi 0, %s36
      %s37 = sphi 0, %s34
      %s38 = sphi 0, %s37
      %s54 = sphi 0, %s38
      %s58 = sphi 0, %s58
      %s60 = sphi 0, %s58
      %s61 = sphi 0, %s60
      %s75 = sphi 0, %s61
      %s79 = sphi 0, %s79
      %s81 = sphi 0, %s79
      %s82 = sphi 0, %s81
      %s96 = sphi 0, %s82
      %s100 = sphi 0, %s100
      %s102 = sphi 0, %s100
      %s103 = sphi 0, %s102
      %s117 = sphi 0, %s103
      %s121 = sphi 0, %s121
      %s123 = sphi 0, %s121
      %s124 = sphi 0, %s123
      %s138 = sphi 0, %s124
      %s142 = sphi 0, %s142
      %s144 = sphi 0, %s142
      %s145 = sphi 0, %s144
      %s159 = sphi 0, %s145
      %s165 = sphi 0, %s167
      %s168 = sphi 0, %s165
      %s169 = sphi 0, %s168
      %s185 = sphi 0, %s169
      %s189 = sphi 0, %s189
      %s191 = sphi 0, %s189
      %s192 = sphi 0, %s191
      %s206 = sphi 0, %s192
      %s210 = sphi 0, %s210
      %s212 = sphi 0, %s210
      %s213 = sphi 0, %s212
      %s227 = sphi 0, %s213
    $region4: #{tpu_custom_call.1} parent=1 // loop_header_branch
      %27 = sbr.rel (%p25) target = $region8
    $region5: #{tpu_custom_call.1} parent=1 // loop_body
      %s29 = ssub.s32 %s24, 1
      %s30 = ssub.s32 %s24, 2
      %s31 = sadd.s32 %s24, 1
      %s32 = ssub.s32 %s24, %s31
      %p33 = scmp.eq.s32.totalorder %s32, 0
      %s35 = sadd.s32 %s34, 1
      %s36 = scalar_select %p33, %s34, %s35
      %p39 = pneg %p33
      %p40 = scmp.eq.s32.totalorder %s24, 7
      %p41 = por %p39, %p40
      %p42 = scmp.ne.s32.totalorder %s34, %s37
      %p43 = scmp.eq.s32.totalorder %s24, 0
      %p44 = por %p42, %p43
      %p45 = scmp.ne.s32.totalorder %s34, %s37
      %p46 = scmp.eq.s32.totalorder %s29, 7
      %p47 = por %p45, %p46
      %p48 = scmp.ne.s32.totalorder %s37, %s38
      %p49 = scmp.eq.s32.totalorder %s29, 0
      %p50 = por %p48, %p49
      %p51 = scmp.ne.s32.totalorder %s37, %s38
      %p52 = scmp.eq.s32.totalorder %s30, 7
      %p53 = por %p51, %p52
      %p55 = scmp.ne.s32.totalorder %s38, %s54
      %p56 = scmp.eq.s32.totalorder %s30, 0
      %p57 = por %p55, %p56
      %s59 = sadd.s32 %s58, 1
      %p62 = scmp.eq.s32.totalorder %s24, 7
      %p63 = scmp.ne.s32.totalorder %s58, %s60
      %p64 = scmp.eq.s32.totalorder %s24, 0
      %p65 = por %p63, %p64
      %p66 = scmp.ne.s32.totalorder %s58, %s60
      %p67 = scmp.eq.s32.totalorder %s29, 7
      %p68 = por %p66, %p67
      %p69 = scmp.ne.s32.totalorder %s60, %s61
      %p70 = scmp.eq.s32.totalorder %s29, 0
      %p71 = por %p69, %p70
      %p72 = scmp.ne.s32.totalorder %s60, %s61
      %p73 = scmp.eq.s32.totalorder %s30, 7
      %p74 = por %p72, %p73
      %p76 = scmp.ne.s32.totalorder %s61, %s75
      %p77 = scmp.eq.s32.totalorder %s30, 0
      %p78 = por %p76, %p77
      %s80 = sadd.s32 %s79, 1
      %p83 = scmp.eq.s32.totalorder %s24, 7
      %p84 = scmp.ne.s32.totalorder %s79, %s81
      %p85 = scmp.eq.s32.totalorder %s24, 0
      %p86 = por %p84, %p85
      %p87 = scmp.ne.s32.totalorder %s79, %s81
      %p88 = scmp.eq.s32.totalorder %s29, 7
      %p89 = por %p87, %p88
      %p90 = scmp.ne.s32.totalorder %s81, %s82
      %p91 = scmp.eq.s32.totalorder %s29, 0
      %p92 = por %p90, %p91
      %p93 = scmp.ne.s32.totalorder %s81, %s82
      %p94 = scmp.eq.s32.totalorder %s30, 7
      %p95 = por %p93, %p94
      %p97 = scmp.ne.s32.totalorder %s82, %s96
      %p98 = scmp.eq.s32.totalorder %s30, 0
      %p99 = por %p97, %p98
      %s101 = sadd.s32 %s100, 1
      %p104 = scmp.eq.s32.totalorder %s24, 7
      %p105 = scmp.ne.s32.totalorder %s100, %s102
      %p106 = scmp.eq.s32.totalorder %s24, 0
      %p107 = por %p105, %p106
      %p108 = scmp.ne.s32.totalorder %s100, %s102
      %p109 = scmp.eq.s32.totalorder %s29, 7
      %p110 = por %p108, %p109
      %p111 = scmp.ne.s32.totalorder %s102, %s103
      %p112 = scmp.eq.s32.totalorder %s29, 0
      %p113 = por %p111, %p112
      %p114 = scmp.ne.s32.totalorder %s102, %s103
      %p115 = scmp.eq.s32.totalorder %s30, 7
      %p116 = por %p114, %p115
      %p118 = scmp.ne.s32.totalorder %s103, %s117
      %p119 = scmp.eq.s32.totalorder %s30, 0
      %p120 = por %p118, %p119
      %s122 = sadd.s32 %s121, 1
      %p125 = scmp.eq.s32.totalorder %s24, 7
      %p126 = scmp.ne.s32.totalorder %s121, %s123
      %p127 = scmp.eq.s32.totalorder %s24, 0
      %p128 = por %p126, %p127
      %p129 = scmp.ne.s32.totalorder %s121, %s123
      %p130 = scmp.eq.s32.totalorder %s29, 7
      %p131 = por %p129, %p130
      %p132 = scmp.ne.s32.totalorder %s123, %s124
      %p133 = scmp.eq.s32.totalorder %s29, 0
      %p134 = por %p132, %p133
      %p135 = scmp.ne.s32.totalorder %s123, %s124
      %p136 = scmp.eq.s32.totalorder %s30, 7
      %p137 = por %p135, %p136
      %p139 = scmp.ne.s32.totalorder %s124, %s138
      %p140 = scmp.eq.s32.totalorder %s30, 0
      %p141 = por %p139, %p140
      %s143 = sadd.s32 %s142, 1
      %p146 = scmp.eq.s32.totalorder %s24, 7
      %p147 = scmp.ne.s32.totalorder %s142, %s144
      %p148 = scmp.eq.s32.totalorder %s24, 0
      %p149 = por %p147, %p148
      %p150 = scmp.ne.s32.totalorder %s142, %s144
      %p151 = scmp.eq.s32.totalorder %s29, 7
      %p152 = por %p150, %p151
      %p153 = scmp.ne.s32.totalorder %s144, %s145
      %p154 = scmp.eq.s32.totalorder %s29, 0
      %p155 = por %p153, %p154
      %p156 = scmp.ne.s32.totalorder %s144, %s145
      %p157 = scmp.eq.s32.totalorder %s30, 7
      %p158 = por %p156, %p157
      %p160 = scmp.ne.s32.totalorder %s145, %s159
      %p161 = scmp.eq.s32.totalorder %s30, 0
      %p162 = por %p160, %p161
      %s163 = ssub.s32 %s24, %s31
      %p164 = scmp.eq.s32.totalorder %s163, 0
      %s166 = sadd.s32 %s165, 1
      %s167 = scalar_select %p164, %s165, %s166
      %p170 = pneg %p164
      %p171 = scmp.eq.s32.totalorder %s24, 7
      %p172 = por %p170, %p171
      %p173 = scmp.ne.s32.totalorder %s165, %s168
      %p174 = scmp.eq.s32.totalorder %s24, 0
      %p175 = por %p173, %p174
      %p176 = scmp.ne.s32.totalorder %s165, %s168
      %p177 = scmp.eq.s32.totalorder %s29, 7
      %p178 = por %p176, %p177
      %p179 = scmp.ne.s32.totalorder %s168, %s169
      %p180 = scmp.eq.s32.totalorder %s29, 0
      %p181 = por %p179, %p180
      %p182 = scmp.ne.s32.totalorder %s168, %s169
      %p183 = scmp.eq.s32.totalorder %s30, 7
      %p184 = por %p182, %p183
      %p186 = scmp.ne.s32.totalorder %s169, %s185
      %p187 = scmp.eq.s32.totalorder %s30, 0
      %p188 = por %p186, %p187
      %s190 = sadd.s32 %s189, 1
      %p193 = scmp.eq.s32.totalorder %s24, 7
      %p194 = scmp.ne.s32.totalorder %s189, %s191
      %p195 = scmp.eq.s32.totalorder %s24, 0
      %p196 = por %p194, %p195
      %p197 = scmp.ne.s32.totalorder %s189, %s191
      %p198 = scmp.eq.s32.totalorder %s29, 7
      %p199 = por %p197, %p198
      %p200 = scmp.ne.s32.totalorder %s191, %s192
      %p201 = scmp.eq.s32.totalorder %s29, 0
      %p202 = por %p200, %p201
      %p203 = scmp.ne.s32.totalorder %s191, %s192
      %p204 = scmp.eq.s32.totalorder %s30, 7
      %p205 = por %p203, %p204
      %p207 = scmp.ne.s32.totalorder %s192, %s206
      %p208 = scmp.eq.s32.totalorder %s30, 0
      %p209 = por %p207, %p208
      %s211 = sadd.s32 %s210, 1
      %p214 = scmp.eq.s32.totalorder %s24, 7
      %p215 = scmp.ne.s32.totalorder %s210, %s212
      %p216 = scmp.eq.s32.totalorder %s24, 0
      %p217 = por %p215, %p216
      %p218 = scmp.ne.s32.totalorder %s210, %s212
      %p219 = scmp.eq.s32.totalorder %s29, 7
      %p220 = por %p218, %p219
      %p221 = scmp.ne.s32.totalorder %s212, %s213
      %p222 = scmp.eq.s32.totalorder %s29, 0
      %p223 = por %p221, %p222
      %p224 = scmp.ne.s32.totalorder %s212, %s213
      %p225 = scmp.eq.s32.totalorder %s30, 7
      %p226 = por %p224, %p225
      %p228 = scmp.ne.s32.totalorder %s213, %s227
      %p229 = scmp.eq.s32.totalorder %s30, 0
      %p230 = por %p228, %p229
      %p231 = scmp.le.s32.totalorder 1, %s24
      %p232 = scmp.lt.s32.totalorder %s24, 9
      %p233 = pnand %p231, %p232
      %p234 = pneg %p233
      // Predicated region
      $region9: #{tpu_custom_call.1} parent=5 // pred_check
        _
      $region10: #{tpu_custom_call.1} parent=5 // pred_check_branch
        %236 = sbr.rel (%p233) target = $region12
      $region11: #{tpu_custom_call.1} parent=5 // pred_region
        %s237 = ssub.s32 %s24, 1
        // Predicated region
        $region13: #{tpu_custom_call.1} parent=11 // pred_check
          %p238 = pneg %p71
        $region14: #{tpu_custom_call.1} parent=11 // pred_check_branch
          %240 = sbr.rel (%p238) target = $region16
        $region15: #{tpu_custom_call.1} parent=11 // pred_region
          %242 = vsyncadd [#allocation8], 0
          %s244 = sshll.u32 %s1, 4
          %s245 = int_to_ptr.hbm [resolvable:$true] %s244
          %s246 = sshll.u32 [#allocation7], 4
          %s247 = int_to_ptr.vmem [resolvable:$true] %s246
          %249 = dma.hbm_to_vmem [thread:$0]  %s245, 128, %s247, [#allocation8]
        $region16: #{tpu_custom_call.1} parent=11 // pred_fallthru
          _
        // Predicated region
        $region17: #{tpu_custom_call.1} parent=11 // pred_check
          %p250 = pneg %p92
        $region18: #{tpu_custom_call.1} parent=11 // pred_check_branch
          %252 = sbr.rel (%p250) target = $region20
        $region19: #{tpu_custom_call.1} parent=11 // pred_region
          %254 = vsyncadd [#allocation8], 0
          %s256 = sshll.u32 %s2, 4
          %s257 = int_to_ptr.hbm [resolvable:$true] %s256
          %s258 = sshll.u32 [#allocation9], 4
          %s259 = int_to_ptr.vmem [resolvable:$true] %s258
          %261 = dma.hbm_to_vmem [thread:$0]  %s257, 128, %s259, [#allocation8]
        $region20: #{tpu_custom_call.1} parent=11 // pred_fallthru
          _
        // Predicated region
        $region21: #{tpu_custom_call.1} parent=11 // pred_check
          %p262 = pneg %p113
        $region22: #{tpu_custom_call.1} parent=11 // pred_check_branch
          %264 = sbr.rel (%p262) target = $region24
        $region23: #{tpu_custom_call.1} parent=11 // pred_region
          %266 = vsyncadd [#allocation11], 0
          %s267 = sshll.u32 %s3, 4
          %s268 = int_to_ptr.hbm [resolvable:$true] %s267
          %s269 = sshll.u32 [#allocation10], 4
          %s270 = int_to_ptr.vmem [resolvable:$true] %s269
          %275 = dma.hbm_to_vmem [thread:$0]  %s268, 256, %s270, [#allocation11], 64, 64, 4
        $region24: #{tpu_custom_call.1} parent=11 // pred_fallthru
          _
        // Predicated region
        $region25: #{tpu_custom_call.1} parent=11 // pred_check
          %p276 = pneg %p134
        $region26: #{tpu_custom_call.1} parent=11 // pred_check_branch
          %278 = sbr.rel (%p276) target = $region28
        $region27: #{tpu_custom_call.1} parent=11 // pred_region
          %280 = vsyncadd [#allocation11], 0
          %s281 = sshll.u32 %s4, 4
          %s282 = int_to_ptr.hbm [resolvable:$true] %s281
          %s283 = sshll.u32 [#allocation12], 4
          %s284 = int_to_ptr.vmem [resolvable:$true] %s283
          %289 = dma.hbm_to_vmem [thread:$0]  %s282, 256, %s284, [#allocation11], 64, 64, 4
        $region28: #{tpu_custom_call.1} parent=11 // pred_fallthru
          _
        // Predicated region
        $region29: #{tpu_custom_call.1} parent=11 // pred_check
          %p290 = pneg %p155
        $region30: #{tpu_custom_call.1} parent=11 // pred_check_branch
          %292 = sbr.rel (%p290) target = $region32
        $region31: #{tpu_custom_call.1} parent=11 // pred_region
          _
        $region32: #{tpu_custom_call.1} parent=11 // pred_fallthru
          _
      $region12: #{tpu_custom_call.1} parent=5 // pred_fallthru
        _
      %p293 = scmp.lt.s32.totalorder %s24, 8
      // Predicated region
      $region33: #{tpu_custom_call.1} parent=5 // pred_check
        %p294 = pneg %p293
      $region34: #{tpu_custom_call.1} parent=5 // pred_check_branch
        %296 = sbr.rel (%p294) target = $region36
      $region35: #{tpu_custom_call.1} parent=5 // pred_region
        // Predicated region
        $region37: #{tpu_custom_call.1} parent=35 // pred_check
          %p297 = pneg %p44
        $region38: #{tpu_custom_call.1} parent=35 // pred_check_branch
          %299 = sbr.rel (%p297) target = $region40
        $region39: #{tpu_custom_call.1} parent=35 // pred_region
          %s300 = sand.u32 %s34, 1
          %s301 = scalar_lea.sflag [#allocation5], %s300
          %s302 = sand.u32 %s34, 1
          %s303 = smul.addr %s302, 4
          %s304 = scalar_lea.vmem [#allocation4], %s303
          %306 = vsyncadd %s301, 0
          %s307 = smul.addr %s24, 4
          %s308 = scalar_lea.hbm %s0, %s307
          %s310 = sshll.u32 %s308, 4
          %s311 = int_to_ptr.hbm [resolvable:$true] %s310
          %s312 = sshll.u32 %s304, 4
          %s313 = int_to_ptr.vmem [resolvable:$true] %s312
          %315 = dma.hbm_to_vmem [thread:$0]  %s311, 64, %s313, %s301
        $region40: #{tpu_custom_call.1} parent=35 // pred_fallthru
          _
      $region36: #{tpu_custom_call.1} parent=5 // pred_fallthru
        _
      %p316 = scmp.le.s32.totalorder 1, %s24
      %p317 = scmp.lt.s32.totalorder %s24, 9
      %p318 = pnand %p316, %p317
      %p319 = pneg %p318
      // Predicated region
      $region41: #{tpu_custom_call.1} parent=5 // pred_check
        _
      $region42: #{tpu_custom_call.1} parent=5 // pred_check_branch
        %321 = sbr.rel (%p318) target = $region44
      $region43: #{tpu_custom_call.1} parent=5 // pred_region
        %s322 = ssub.s32 %s24, 1
        %s323 = sand.u32 %s37, 1
        %s324 = scalar_lea.sflag [#allocation5], %s323
        %s325 = sand.u32 %s37, 1
        %s326 = smul.addr %s325, 4
        %s327 = scalar_lea.vmem [#allocation4], %s326
        // Predicated region
        $region45: #{tpu_custom_call.1} parent=43 // pred_check
          %p328 = pneg %p50
        $region46: #{tpu_custom_call.1} parent=43 // pred_check_branch
          %330 = sbr.rel (%p328) target = $region48
        $region47: #{tpu_custom_call.1} parent=43 // pred_region
          %332 = dma.done %s324, 64
        $region48: #{tpu_custom_call.1} parent=43 // pred_fallthru
          _
        // Predicated region
        $region49: #{tpu_custom_call.1} parent=43 // pred_check
          %p333 = pneg %p71
        $region50: #{tpu_custom_call.1} parent=43 // pred_check_branch
          %335 = sbr.rel (%p333) target = $region52
        $region51: #{tpu_custom_call.1} parent=43 // pred_region
          %337 = dma.done [#allocation8], 128
        $region52: #{tpu_custom_call.1} parent=43 // pred_fallthru
          _
        // Predicated region
        $region53: #{tpu_custom_call.1} parent=43 // pred_check
          %p338 = pneg %p92
        $region54: #{tpu_custom_call.1} parent=43 // pred_check_branch
          %340 = sbr.rel (%p338) target = $region56
        $region55: #{tpu_custom_call.1} parent=43 // pred_region
          %342 = dma.done [#allocation8], 128
        $region56: #{tpu_custom_call.1} parent=43 // pred_fallthru
          _
        // Predicated region
        $region57: #{tpu_custom_call.1} parent=43 // pred_check
          %p343 = pneg %p113
        $region58: #{tpu_custom_call.1} parent=43 // pred_check_branch
          %345 = sbr.rel (%p343) target = $region60
        $region59: #{tpu_custom_call.1} parent=43 // pred_region
          %347 = dma.done [#allocation11], 256
        $region60: #{tpu_custom_call.1} parent=43 // pred_fallthru
          _
        // Predicated region
        $region61: #{tpu_custom_call.1} parent=43 // pred_check
          %p348 = pneg %p134
        $region62: #{tpu_custom_call.1} parent=43 // pred_check_branch
          %350 = sbr.rel (%p348) target = $region64
        $region63: #{tpu_custom_call.1} parent=43 // pred_region
          %352 = dma.done [#allocation11], 256
        $region64: #{tpu_custom_call.1} parent=43 // pred_fallthru
          _
        %s353 = sand.u32 %s37, 1
        %s354 = scalar_lea.sflag [#allocation5], %s353
        %s355 = sand.u32 %s37, 1
        %s356 = smul.addr %s355, 4
        %s357 = scalar_lea.vmem [#allocation4], %s356
        %p358 = pneg %p50
        %p359 = pneg %p47
        %p360 = pneg %p71
        %p361 = pneg %p68
        %p362 = pneg %p92
        %p363 = pneg %p89
        %p364 = pneg %p113
        %p365 = pneg %p110
        %p366 = pneg %p134
        %p367 = pneg %p131
        %p368 = pneg %p155
        %p369 = pneg %p152
        %p370 = pneg %p181
        %p371 = pneg %p178
        %s372 = sand.u32 %s168, 1
        %s373 = scalar_lea.sflag [#allocation6], %s372
        %s374 = sand.u32 %s168, 1
        %s375 = smul.addr %s374, 4
        %s376 = scalar_lea.vmem [#allocation13], %s375
        %p377 = pneg %p202
        %p378 = pneg %p199
        %p379 = pneg %p223
        %p380 = pneg %p220
        %p382 = scmp.eq.s32.totalorder %s29, 0
        // Predicated region
        $region65: #{tpu_custom_call.1} parent=43 // pred_check
          %p383 = pneg %p382
        $region66: #{tpu_custom_call.1} parent=43 // pred_check_branch
          %385 = sbr.rel (%p383) target = $region68
        $region67: #{tpu_custom_call.1} parent=43 // pred_region
          %v386 = vld [vmem:[#allocation7] sm:$0xff]
          %vm387 = vcmask 261120
          %388 = vst.msk [vmem:[#allocation2] sm:$0xff] %vm387, %v386
          %v389 = vld [vmem:[#allocation9] sm:$0xff]
          %390 = vst.msk [vmem:[#allocation3] sm:$0xff] %vm387, %v389
        $region68: #{tpu_custom_call.1} parent=43 // pred_fallthru
          _
        %v391 = vld [vmem:[%s327] sm:$0xf]
        %v392 = vld [vmem:[#allocation2] sm:$0xff]
        %v393 = vld [vmem:[#allocation3] sm:$0xff]
        %v394 = vld [vmem:[#allocation10] sm:$0xf]
        %v395 = vld [vmem:[#allocation10 + $0x4] sm:$0xf]
        %v396 = vld [vmem:[#allocation10 + $0x8] sm:$0xf]
        %v397 = vld [vmem:[#allocation10 + $0xc] sm:$0xf]
        %v398 = vpack.c.bf16 %v392, %v392
        %v399 = vld [vmem:[#allocation12] sm:$0xf]
        %v400 = vld [vmem:[#allocation12 + $0x4] sm:$0xf]
        %v401 = vld [vmem:[#allocation12 + $0x8] sm:$0xf]
        %v402 = vld [vmem:[#allocation12 + $0xc] sm:$0xf]
        %v407 = vunpack.c.l.b16 %v399
        %v408 = vunpack.c.l.b16 %v400
        %v409 = vunpack.c.l.b16 %v401
        %v410 = vunpack.c.l.b16 %v402
        %v411 = vpack.c.b16 %v408, %v407
        %v412 = vpack.c.b16 %v410, %v409
        %vm415 = vcmask 261120
        %v417 = vsel %vm415, %v398, 0
        %419 = vmatpush.bf16.msra.mxu0 0
        %420 = vmatpush.bf16.msra.mxu0 0
        %421 = vmatpush.bf16.msra.mxu0 0
        %422 = vmatpush.bf16.msra.mxu0 0
        %423 = vmatpush.bf16.msra.mxu0 0
        %424 = vmatpush.bf16.msra.mxu0 0
        %425 = vmatpush.bf16.msra.mxu0 %v412
        %426 = vmatpush.bf16.msra.mxu0 %v411
        %427 = vmatmul.bf16.gmra.mxu0 %v417
        %v428 = vpop.f32.mrf.mxu0
        %v429 = vadd.f32 0.0, %v428
        %v430 = vpop.f32.mrf.mxu0
        %431 = vdwg.mxu0
        %v436 = vunpack.c.l.b16 %v394
        %v437 = vunpack.c.l.b16 %v395
        %v438 = vunpack.c.l.b16 %v396
        %v439 = vunpack.c.l.b16 %v397
        %v440 = vpack.c.b16 %v437, %v436
        %v441 = vpack.c.b16 %v439, %v438
        %v445 = vsel %vm415, %v391, 0
        %447 = vmatpush.bf16.msra.mxu0 0
        %448 = vmatpush.bf16.msra.mxu0 0
        %449 = vmatpush.bf16.msra.mxu0 0
        %450 = vmatpush.bf16.msra.mxu0 0
        %451 = vmatpush.bf16.msra.mxu0 0
        %452 = vmatpush.bf16.msra.mxu0 0
        %453 = vmatpush.bf16.msra.mxu0 %v441
        %454 = vmatpush.bf16.msra.mxu0 %v440
        %455 = vmatmul.bf16.gmra.mxu0 %v445
        %v456 = vpop.f32.mrf.mxu0
        %v457 = vadd.f32 %v429, %v456
        %v458 = vpop.f32.mrf.mxu0
        %459 = vdwg.mxu0
        %v460 = vld [vmem:[%s5] sm:$0x1]
        %v462 = vperm.slane %v460, 0
        %v464 = vadd.f32 %v457, %v462
        %v465 = vxor.u32 %v464, 2147483648
        %v466 = vmul.f32 %v465, 1.442695
        %v467 = vpow.pop %v466
        %v468 = vadd.f32 %v467, 1.0
        %v469 = vrcp.pop %v468
        %v470 = vmul.f32 %v468, %v469
        %v471 = vsub.f32 1.0, %v470
        %v472 = vmul.f32 %v469, %v471
        %v473 = vadd.f32 %v469, %v472
        %vm474 = vweird.f32 %v468
        %vm475 = vweird.f32 %v469
        %vm476 = vmor %vm474, %vm475
        %v477 = vsel %vm476, %v469, %v473
        %v478 = vand.u32 2147483647, %v468
        %vm479 = vcmp.eq.f32.partialorder %v478, 8.507059e+37
        %v480 = vand.u32 %v468, 2147483648
        %v481 = vor.u32 1.1754944e-38, %v480
        %v482 = vsel %vm479, %v481, %v477
        %v483 = vmul.f32 1.0, %v482
        %v484 = vtanh.pop %v464
        %486 = vrot.lane.b32.xlu0 %v393, 32
        %v487 = vpop.permute.xlu0 %486
        %v489 = vmul.f32 %v483, %v487
        %491 = vrot.lane.b32.xlu0 %v484, 64
        %v492 = vpop.permute.xlu0 %491
        %v494 = vmul.f32 %v483, %v492
        %496 = vrot.lane.b32.xlu0 %v494, 32
        %v497 = vpop.permute.xlu0 %496
        %v499 = vadd.f32 %v489, %v497
        %v500 = vtanh.pop %v499
        %502 = vrot.lane.b32.xlu0 %v500, 64
        %v503 = vpop.permute.xlu0 %502
        %v505 = vmul.f32 %v483, %v503
        %507 = vrot.lane.b32.xlu0 %v505, 32
        %v508 = vpop.permute.xlu0 %507
        %510 = vst.msk [vmem:[#allocation2] sm:$0xff] %vm415, %v508
        %512 = vrot.lane.b32.xlu0 %v499, 96
        %v513 = vpop.permute.xlu0 %512
        %515 = vst.msk [vmem:[#allocation3] sm:$0xff] %vm415, %v513
        %v516 = vpack.c.bf16 %v505, %v505
        %518 = vrot.lane.b32.xlu0 %v516, 32
        %v519 = vpop.permute.xlu0 %518
        %vm521 = vcmask 257024
        %522 = vst.msk [vmem:[%s376] sm:$0xf] %vm521, %v519
        %p523 = scmp.eq.s32.totalorder %s29, 7
        // Predicated region
        $region69: #{tpu_custom_call.1} parent=43 // pred_check
          %p524 = pneg %p523
        $region70: #{tpu_custom_call.1} parent=43 // pred_check_branch
          %526 = sbr.rel (%p524) target = $region72
        $region71: #{tpu_custom_call.1} parent=43 // pred_region
          %527 = vst.msk [vmem:[#allocation14] sm:$0xff] %vm415, %v508
          %528 = vst.msk [vmem:[#allocation16] sm:$0xff] %vm415, %v513
        $region72: #{tpu_custom_call.1} parent=43 // pred_fallthru
          _
        %s529 = sand.u32 %s168, 1
        %s530 = scalar_lea.sflag [#allocation6], %s529
        %s531 = sand.u32 %s168, 1
        %s532 = smul.addr %s531, 4
        %s533 = scalar_lea.vmem [#allocation13], %s532
        // Predicated region
        $region73: #{tpu_custom_call.1} parent=43 // pred_check
          %p534 = pneg %p178
        $region74: #{tpu_custom_call.1} parent=43 // pred_check_branch
          %536 = sbr.rel (%p534) target = $region76
        $region75: #{tpu_custom_call.1} parent=43 // pred_region
          %538 = vsyncadd %s530, 0
          %s539 = smul.addr %s29, 4
          %s540 = scalar_lea.hbm %s6, %s539
          %s542 = sshll.u32 %s533, 4
          %s543 = int_to_ptr.vmem [resolvable:$true] %s542
          %s544 = sshll.u32 %s540, 4
          %s545 = int_to_ptr.hbm [resolvable:$true] %s544
          %547 = dma.vmem_to_hbm [thread:$0]  %s543, 64, %s545, %s530
        $region76: #{tpu_custom_call.1} parent=43 // pred_fallthru
          _
        // Predicated region
        $region77: #{tpu_custom_call.1} parent=43 // pred_check
          %p548 = pneg %p199
        $region78: #{tpu_custom_call.1} parent=43 // pred_check_branch
          %550 = sbr.rel (%p548) target = $region80
        $region79: #{tpu_custom_call.1} parent=43 // pred_region
          %552 = vsyncadd [#allocation15], 0
          %s554 = sshll.u32 [#allocation14], 4
          %s555 = int_to_ptr.vmem [resolvable:$true] %s554
          %s556 = sshll.u32 %s7, 4
          %s557 = int_to_ptr.hbm [resolvable:$true] %s556
          %559 = dma.vmem_to_hbm [thread:$0]  %s555, 128, %s557, [#allocation15]
        $region80: #{tpu_custom_call.1} parent=43 // pred_fallthru
          _
        // Predicated region
        $region81: #{tpu_custom_call.1} parent=43 // pred_check
          %p560 = pneg %p220
        $region82: #{tpu_custom_call.1} parent=43 // pred_check_branch
          %562 = sbr.rel (%p560) target = $region84
        $region83: #{tpu_custom_call.1} parent=43 // pred_region
          %564 = vsyncadd [#allocation15], 0
          %s566 = sshll.u32 [#allocation16], 4
          %s567 = int_to_ptr.vmem [resolvable:$true] %s566
          %s568 = sshll.u32 %s8, 4
          %s569 = int_to_ptr.hbm [resolvable:$true] %s568
          %571 = dma.vmem_to_hbm [thread:$0]  %s567, 128, %s569, [#allocation15]
        $region84: #{tpu_custom_call.1} parent=43 // pred_fallthru
          _
        // Predicated region
        $region85: #{tpu_custom_call.1} parent=43 // pred_check
          %p572 = pneg %p199
        $region86: #{tpu_custom_call.1} parent=43 // pred_check_branch
          %574 = sbr.rel (%p572) target = $region88
        $region87: #{tpu_custom_call.1} parent=43 // pred_region
          %576 = dma.done [#allocation15], 128
        $region88: #{tpu_custom_call.1} parent=43 // pred_fallthru
          _
        // Predicated region
        $region89: #{tpu_custom_call.1} parent=43 // pred_check
          %p577 = pneg %p220
        $region90: #{tpu_custom_call.1} parent=43 // pred_check_branch
          %579 = sbr.rel (%p577) target = $region92
        $region91: #{tpu_custom_call.1} parent=43 // pred_region
          %581 = dma.done [#allocation15], 128
        $region92: #{tpu_custom_call.1} parent=43 // pred_fallthru
          _
      $region44: #{tpu_custom_call.1} parent=5 // pred_fallthru
        _
      %p582 = scmp.le.s32.totalorder 2, %s24
      // Predicated region
      $region93: #{tpu_custom_call.1} parent=5 // pred_check
        %p583 = pneg %p582
      $region94: #{tpu_custom_call.1} parent=5 // pred_check_branch
        %585 = sbr.rel (%p583) target = $region96
      $region95: #{tpu_custom_call.1} parent=5 // pred_region
        %s586 = ssub.s32 %s24, 2
        // Predicated region
        $region97: #{tpu_custom_call.1} parent=95 // pred_check
          %p587 = pneg %p184
        $region98: #{tpu_custom_call.1} parent=95 // pred_check_branch
          %589 = sbr.rel (%p587) target = $region100
        $region99: #{tpu_custom_call.1} parent=95 // pred_region
          %s590 = sand.u32 %s169, 1
          %s591 = scalar_lea.sflag [#allocation6], %s590
          %s592 = sand.u32 %s169, 1
          %s593 = smul.addr %s592, 4
          %s594 = scalar_lea.vmem [#allocation13], %s593
          %596 = dma.done %s591, 64
        $region100: #{tpu_custom_call.1} parent=95 // pred_fallthru
          _
      $region96: #{tpu_custom_call.1} parent=5 // pred_fallthru
        _
    $region6: #{tpu_custom_call.1} parent=1 // loop_footer
      %s28 = sadd.s32 1, %s24
    $region7: #{tpu_custom_call.1} parent=1 // loop_footer_branch
      %23 = sbr.rel target = $region3
    $region8: #{tpu_custom_call.1} parent=1 // loop_exit
      _
    %597 = vsyncpa [#allocation5], 1
    %s598 = scalar_lea.sflag [#allocation5], 1
    %599 = vsyncpa %s598, 1
    %600 = vsyncpa [#allocation8], 1
    %601 = vsyncpa [#allocation11], 1
    %602 = vsyncpa [#allocation6], 1
    %s603 = scalar_lea.sflag [#allocation6], 1
    %604 = vsyncpa %s603, 1
    %605 = vsyncpa [#allocation15], 1

</llo_original>
